<compile_context>
chip_gen: v5e
topology: v5e:2x2
jax: 0.10.0
libtpu: 0.0.40
codegen_flags: <defaults>
</compile_context>

<pallas_src>
import jax
import jax.numpy as jnp
from jax.experimental import pallas as pl
from jax.experimental.pallas import tpu as pltpu

_LANE = 128
_VMEM_LIMIT_BYTES = 32 * 1024 * 1024    # explicit scoped-VMEM limit (safe on v5e/v6e/v7x)
_VMEM_BUDGET_BYTES = 16 * 1024 * 1024   # target live block footprint (2x in + 2x out)
_TARGET_STREAM_BYTES = 4 * 1024 * 1024  # per-stream block target (amortizes ~0.35us/step)


def _sublane_multiple(dtype) -> int:
    """Native sublane packing of the second-to-last dim (f32:8, bf16:16, int8:32)."""
    return {4: 8, 2: 16, 1: 32}.get(jnp.dtype(dtype).itemsize, 8)


def _largest_divisor_leq(n: int, cap: int) -> int:
    """Largest divisor of n that is <= cap (at least 1)."""
    cap = max(1, min(n, cap))
    for d in range(cap, 0, -1):
        if n % d == 0:
            return d
    return 1


def _split_lane_flat(x_flat, chunk_sizes, L, itemsize):
    """Lane-contiguous split.

    x_flat is (B, C*L); all chunks are equal and each chunk extent cs*L is a
    multiple of 128, so chunk j is the lane window [j*cs*L, (j+1)*cs*L).
    One HBM read + one HBM write per byte, no masked partial-sublane stores,
    the kernel body is a whole-tile passthrough.
    """
    B, N = x_flat.shape
    dtype = x_flat.dtype
    n_chunks = len(chunk_sizes)
    cs = chunk_sizes[0]
    M = cs * L                              # lane extent of one chunk (multiple of 128)

    # n_chunks input streams + n_chunks output streams, each double-buffered:
    #   footprint ~= 4 * n_chunks * (tile_b * tile_n * itemsize)
    per_stream = max(_LANE * 8 * itemsize,
                     min(_TARGET_STREAM_BYTES, _VMEM_BUDGET_BYTES // (4 * n_chunks)))

    lane_units = M // _LANE
    tile_b = 8 if B % 8 == 0 else B         # full dim is always layout-legal
    cap_units = max(1, per_stream // (tile_b * _LANE * itemsize))
    tile_n = _LANE * _largest_divisor_leq(lane_units, cap_units)
    if B % 8 == 0 and tile_n == M:
        # Whole chunk row covered; spend leftover budget on more batch rows.
        cap_b = max(1, per_stream // (M * 8 * itemsize))
        tile_b = 8 * _largest_divisor_leq(B // 8, cap_b)

    # v7x has 2 TensorCores sharded over "parallel" axes: ensure >= 2 grid steps.
    if (B // tile_b) * (M // tile_n) == 1:
        if lane_units >= 2:
            tile_n = _LANE * _largest_divisor_leq(lane_units, lane_units // 2)
        elif B % 16 == 0:
            tile_b = B // 2

    grid = (B // tile_b, M // tile_n)
    blocks_per_chunk = M // tile_n

    in_specs = [
        pl.BlockSpec((tile_b, tile_n),
                     lambda b, l, j=j, bpc=blocks_per_chunk: (b, j * bpc + l))
        for j in range(n_chunks)
    ]
    out_specs = tuple(
        pl.BlockSpec((tile_b, tile_n), lambda b, l: (b, l)) for _ in range(n_chunks)
    )
    out_shape = tuple(jax.ShapeDtypeStruct((B, M), dtype) for _ in range(n_chunks))

    def kernel(*refs):
        in_refs, out_refs = refs[:n_chunks], refs[n_chunks:]
        for i_ref, o_ref in zip(in_refs, out_refs):
            o_ref[...] = i_ref[...]          # whole-tile, lane-dense passthrough

    footprint = 4 * n_chunks * tile_b * tile_n * itemsize
    outs = pl.pallas_call(
        kernel,
        out_shape=out_shape,
        grid_spec=pltpu.PrefetchScalarGridSpec(
            num_scalar_prefetch=0,
            grid=grid,
            in_specs=in_specs,
            out_specs=out_specs,
        ),
        compiler_params=pltpu.CompilerParams(
            dimension_semantics=("parallel", "parallel"),
            vmem_limit_bytes=max(_VMEM_LIMIT_BYTES, footprint + (4 << 20)),
        ),
        cost_estimate=pl.CostEstimate(
            flops=0, transcendentals=0, bytes_accessed=2 * B * N * itemsize),
    )(*([x_flat] * n_chunks))
    return list(outs)                        # each (B, cs*L)


def _split_channel_3d(x3, chunk_sizes, itemsize):
    """Channel-axis split on the (B, C, L) layout.

    Used when the flattened lane split is not applicable (remainder chunk,
    cs*L not 128-aligned, awkward batch).  If every chunk is sublane-aligned
    the input is windowed per chunk at the DMA level (pure passthrough body);
    otherwise one full-C input block is sliced in-kernel (always correct).
    """
    B, C, L = x3.shape
    dtype = x3.dtype
    n_chunks = len(chunk_sizes)
    sub = _sublane_multiple(dtype)
    cs0 = chunk_sizes[0]
    equal = all(cs == cs0 for cs in chunk_sizes)
    passthrough = equal and (cs0 % sub == 0)

    # Footprint ~= 2x input blocks + 2x output blocks = 4 * C * tile_b * tile_l.
    if L % _LANE == 0 and 4 * C * L * itemsize > _VMEM_BUDGET_BYTES:
        cap_l = max(1, _VMEM_BUDGET_BYTES // (4 * C * _LANE * itemsize))
        tile_l = _LANE * _largest_divisor_leq(L // _LANE, cap_l)
    else:
        tile_l = L
    cap_b = max(1, _VMEM_BUDGET_BYTES // (4 * C * tile_l * itemsize))
    tile_b = _largest_divisor_leq(B, cap_b)

    # >= 2 grid steps for v7x's two TensorCores when the shape allows.
    if (B // tile_b) * (L // tile_l) == 1:
        if B >= 2:
            tile_b = _largest_divisor_leq(B, B // 2)
        elif L % _LANE == 0 and L // _LANE >= 2:
            tile_l = _LANE * _largest_divisor_leq(L // _LANE, (L // _LANE) // 2)

    grid = (B // tile_b, L // tile_l)
    out_shape = tuple(jax.ShapeDtypeStruct((B, cs, L), dtype) for cs in chunk_sizes)
    out_specs = tuple(
        pl.BlockSpec((tile_b, cs, tile_l), lambda b, l: (b, 0, l)) for cs in chunk_sizes
    )

    if passthrough:
        in_specs = [
            pl.BlockSpec((tile_b, cs0, tile_l), lambda b, l, j=j: (b, j, l))
            for j in range(n_chunks)
        ]

        def kernel(*refs):
            in_refs, out_refs = refs[:n_chunks], refs[n_chunks:]
            for i_ref, o_ref in zip(in_refs, out_refs):
                o_ref[...] = i_ref[...]      # per-chunk DMA window, pure passthrough

        args = [x3] * n_chunks
    else:
        in_specs = [pl.BlockSpec((tile_b, C, tile_l), lambda b, l: (b, 0, l))]

        def kernel(x_ref, *o_refs):
            off = 0
            for o_ref, cs in zip(o_refs, chunk_sizes):
                o_ref[...] = x_ref[:, off:off + cs, :]   # static slice, pure copy
                off += cs

        args = [x3]

    footprint = 4 * C * tile_b * tile_l * itemsize
    outs = pl.pallas_call(
        kernel,
        out_shape=out_shape,
        grid_spec=pltpu.PrefetchScalarGridSpec(
            num_scalar_prefetch=0,
            grid=grid,
            in_specs=in_specs,
            out_specs=out_specs,
        ),
        compiler_params=pltpu.CompilerParams(
            dimension_semantics=("parallel", "parallel"),
            vmem_limit_bytes=max(_VMEM_LIMIT_BYTES, footprint + (4 << 20)),
        ),
        cost_estimate=pl.CostEstimate(
            flops=0, transcendentals=0, bytes_accessed=2 * B * C * L * itemsize),
    )(*args)
    return list(outs)                        # each (B, cs_j, L)


def split_hollow_conv1d(x, outputs_per_input: int):
    """Pallas forward of SplitHollowConv1d.

    x: array of shape (..., C, L).  Returns a tuple of chunks split along
    dim=-2 with split_size = C // outputs_per_input (torch.split semantics,
    including a smaller trailing remainder chunk when C % split_size != 0).
    """
    k = int(outputs_per_input)
    *lead, C, L = x.shape
    split_size = C // k
    assert split_size >= 1, "x.shape[-2] // outputs_per_input must be >= 1"

    # torch.split(split_size): full chunks + optional smaller remainder chunk.
    n_full = C // split_size
    rem = C - n_full * split_size
    chunk_sizes = [split_size] * n_full + ([rem] if rem else [])

    B = 1
    for d in lead:
        B *= int(d)
    itemsize = jnp.dtype(x.dtype).itemsize

    lane_flat_ok = (
        rem == 0
        and (split_size * L) % _LANE == 0
        # flattened layout puts the batch on the sublane axis; keep it
        # layout-legal / reasonably sized (otherwise the 3-D path handles it)
        and (B % 8 == 0 or B * _LANE * itemsize <= _VMEM_BUDGET_BYTES // 4)
    )

    if lane_flat_ok:
        x_flat = jnp.reshape(x, (B, C * L))                      # free reshape
        outs = _split_lane_flat(x_flat, chunk_sizes, L, itemsize)
    else:
        x3 = jnp.reshape(x, (B, C, L))                           # free reshape
        outs = _split_channel_3d(x3, chunk_sizes, itemsize)

    return tuple(
        jnp.reshape(o, (*lead, cs, L)) for o, cs in zip(outs, chunk_sizes)
    )


if __name__ == "__main__":
    def ref_split(x, k):
        C = x.shape[-2]
        s = C // k
        sizes = [s] * (C // s) + ([C % s] if C % s else [])
        outs, off = [], 0
        for cs in sizes:
            outs.append(x[..., off:off + cs, :])
            off += cs
        return tuple(outs)

    def check(x, k):
        outs = jax.block_until_ready(split_hollow_conv1d(x, k))
        refs = ref_split(x, k)
        assert len(outs) == len(refs)
        for o, r in zip(outs, refs):
            assert o.shape == r.shape and o.dtype == r.dtype
            assert jnp.array_equal(o, r)

    key = jax.random.PRNGKey(0)
    k0, k1, k2, k3, k4 = jax.random.split(key, 5)

    # 1) Conv1d activations (B, C, L) = (2, 4, 8), k=2: fallback slice path.
    check(jax.random.normal(k0, (2, 4, 8), dtype=jnp.float32), 2)
    # 2) torch.split remainder semantics: C=5, split_size=2 -> chunks (2, 2, 1).
    check(jax.random.normal(k1, (2, 5, 8), dtype=jnp.float32), 2)
    # 3) Lane-dense flattened split (cs*L % 128 == 0) + extra leading dim.
    check(jax.random.normal(k2, (2, 2, 6, 256), dtype=jnp.float32), 3)
    # 4) Sublane-aligned chunks (cs=8): per-chunk DMA windows on the 3-D path.
    check(jax.random.normal(k3, (2, 16, 8), dtype=jnp.float32), 2)
    # 5) Flattened split with batch a multiple of 8.
    check(jax.random.normal(k4, (8, 4, 128), dtype=jnp.float32), 2)

    print("KERNEL_OK")
</pallas_src>

<mosaic_0001>
module attributes {stable_mosaic.version = 11 : i64} {
  func.func @kernel(%arg0: i32, %arg1: i32, %arg2: memref<1x4x8xf32, #tpu.memory_space<vmem>>, %arg3: memref<1x2x8xf32, #tpu.memory_space<vmem>>, %arg4: memref<1x2x8xf32, #tpu.memory_space<vmem>>) attributes {dimension_semantics = [#tpu.dimension_semantics<parallel>, #tpu.dimension_semantics<parallel>], iteration_bounds = array<i64: 2, 1>, scalar_prefetch = 0 : i64, scratch_operands = 0 : i64, tpu.core_type = #tpu.core_type<tc>, window_params = [{transform_indices = @transform_0, window_bounds = array<i64: 1, 4, 8>}, {transform_indices = @transform_1, window_bounds = array<i64: 1, 2, 8>}, {transform_indices = @transform_2, window_bounds = array<i64: 1, 2, 8>}]} {
    %c0 = arith.constant 0 : index
    %c0_0 = arith.constant 0 : index
    %c0_1 = arith.constant 0 : index
    %0 = vector.load %arg2[%c0, %c0_0, %c0_1] : memref<1x4x8xf32, #tpu.memory_space<vmem>>, vector<1x2x8xf32>
    %c0_2 = arith.constant 0 : index
    %c0_3 = arith.constant 0 : index
    %c0_4 = arith.constant 0 : index
    %1 = vector.load %arg3[%c0_2, %c0_3, %c0_4] : memref<1x2x8xf32, #tpu.memory_space<vmem>>, vector<1x2x8xf32>
    tpu.vector_store %arg3[%c0_2, %c0_3, %c0_4], %0 {strides = array<i32>} : memref<1x2x8xf32, #tpu.memory_space<vmem>>, vector<1x2x8xf32>,
    %c0_5 = arith.constant 0 : index
    %c2 = arith.constant 2 : index
    %c0_6 = arith.constant 0 : index
    %2 = vector.load %arg2[%c0_5, %c2, %c0_6] : memref<1x4x8xf32, #tpu.memory_space<vmem>>, vector<1x2x8xf32>
    %c0_7 = arith.constant 0 : index
    %c0_8 = arith.constant 0 : index
    %c0_9 = arith.constant 0 : index
    %3 = vector.load %arg4[%c0_7, %c0_8, %c0_9] : memref<1x2x8xf32, #tpu.memory_space<vmem>>, vector<1x2x8xf32>
    tpu.vector_store %arg4[%c0_7, %c0_8, %c0_9], %2 {strides = array<i32>} : memref<1x2x8xf32, #tpu.memory_space<vmem>>, vector<1x2x8xf32>,
    return
  }
  func.func @transform_0(%arg0: i32, %arg1: i32) -> (i32, i32, i32) {
    %c0_i32 = arith.constant 0 : i32
    %c0_i32_0 = arith.constant 0 : i32
    return %arg0, %c0_i32, %arg1 : i32, i32, i32
  }
  func.func @transform_1(%arg0: i32, %arg1: i32) -> (i32, i32, i32) {
    %c0_i32 = arith.constant 0 : i32
    %c0_i32_0 = arith.constant 0 : i32
    return %arg0, %c0_i32, %arg1 : i32, i32, i32
  }
  func.func @transform_2(%arg0: i32, %arg1: i32) -> (i32, i32, i32) {
    %c0_i32 = arith.constant 0 : i32
    %c0_i32_0 = arith.constant 0 : i32
    return %arg0, %c0_i32, %arg1 : i32, i32, i32
  }
}

</mosaic_0001>

<llo_original>
// kernel: tpu_custom_call.1
$region0: #{tpu_custom_call.1}
  #allocation0 [shape = 'u32[]', space=smem, size = 0x4, offset = 0x4, fixed_abs, tag = 'smem constant byte address 0x4 - core index']
  #allocation1 [shape = 'u32[72,128]{1,0:T(1,128)}', space=vmem, size = 0x9000, scoped, tag = 'internal scratch']
  %s0 = inlined_call_operand.hbm [shape: f32[2,4,8], index: 0, kind: input, shape index: {}]
  %s1 = inlined_call_operand.hbm [shape: f32[2,2,8], index: 1, kind: output, shape index: {0}]
  %s2 = inlined_call_operand.hbm [shape: f32[2,2,8], index: 2, kind: output, shape index: {1}]
  %3 = xla_tuple %s1, %s2
  %s4 = sld [smem:[#allocation0]]
  $region49: #{tpu_custom_call.1} parent=0
    _
  %s6 = ssub.s32 1, %s4
  %s7 = scalar_select 0, %s6, %s4
  $region1: #{tpu_custom_call.1} parent=0
    #allocation2 [shape = 'u8[4096]{0}', space=vmem, size = 0x1000, scoped, tag = 'input window, operand 0']
    #allocation3 [shape = 's32[2]{0}', space=sflag, size = 0x8, scoped, tag = 'scoped memory for tpu_custom_call.1']
    #allocation4 [shape = 's32[2]{0}', space=sflag, size = 0x8, scoped, tag = 'scoped memory for tpu_custom_call.1']
    #allocation5 [shape = 'u8[2048]{0}', space=vmem, size = 0x800, scoped, tag = 'output window, operand 0']
    #allocation6 [shape = 'u8[2048]{0}', space=vmem, size = 0x800, scoped, tag = 'output window, operand 1']
    #allocation7 [shape = 's32[2]{0}', space=sflag, size = 0x8, scoped, tag = 'scoped memory for tpu_custom_call.1']
    %8 = vsyncpa [#allocation3], 0
    %s9 = scalar_lea.sflag [#allocation3], 1
    %10 = vsyncpa %s9, 0
    %11 = vsyncpa [#allocation4], 0
    %s12 = scalar_lea.sflag [#allocation4], 1
    %13 = vsyncpa %s12, 0
    %14 = vsyncpa [#allocation7], 0
    %s15 = scalar_lea.sflag [#allocation7], 1
    %16 = vsyncpa %s15, 0
    loop: start=0, step=1, limit=4
    $region2: #{tpu_custom_call.1} parent=1 // loop_pre_header
      _
    $region3: #{tpu_custom_call.1} parent=1 // loop_header
      %s18 = sphi 0, %s22
      %p19 = scmp.ge.s32.totalorder %s18, 4
      %s25 = sphi 0, %s37
      %s26 = sphi 0, %s33
      %s27 = sphi 0, %s25
      %s28 = sphi 0, %s26
      %s29 = sphi 0, %s27
      %s30 = sphi 0, %s28
      %s42 = sphi 0, %s44
      %s45 = sphi 0, %s42
      %s46 = sphi 0, %s45
      %s62 = sphi 0, %s46
      %s70 = sphi 0, %s72
      %s73 = sphi 0, %s70
      %s74 = sphi 0, %s73
      %s90 = sphi 0, %s74
      %s98 = sphi 0, %s100
      %s101 = sphi 0, %s98
      %s102 = sphi 0, %s101
      %s118 = sphi 0, %s102
    $region4: #{tpu_custom_call.1} parent=1 // loop_header_branch
      %21 = sbr.rel (%p19) target = $region8
    $region5: #{tpu_custom_call.1} parent=1 // loop_body
      %s23 = ssub.s32 %s18, 1
      %s24 = ssub.s32 %s18, 2
      %s31 = sadd.s32 1, %s26
      %p32 = scmp.ge.s32.totalorder %s31, 1
      %s33 = scalar_select %p32, 0, %s31
      %s34 = sadd.s32 1, %s25
      %s35 = scalar_select %p32, %s34, %s25
      %p36 = scmp.ge.s32.totalorder %s35, 2
      %s37 = scalar_select %p36, 0, %s35
      %s38 = ssub.s32 %s25, %s37
      %s39 = ssub.s32 %s26, %s33
      %s40 = sor.u32 %s38, %s39
      %p41 = scmp.eq.s32.totalorder %s40, 0
      %s43 = sadd.s32 %s42, 1
      %s44 = scalar_select %p41, %s42, %s43
      %p47 = pneg %p41
      %p48 = scmp.eq.s32.totalorder %s18, 1
      %p49 = por %p47, %p48
      %p50 = scmp.ne.s32.totalorder %s42, %s45
      %p51 = scmp.eq.s32.totalorder %s18, 0
      %p52 = por %p50, %p51
      %p53 = scmp.ne.s32.totalorder %s42, %s45
      %p54 = scmp.eq.s32.totalorder %s23, 1
      %p55 = por %p53, %p54
      %p56 = scmp.ne.s32.totalorder %s45, %s46
      %p57 = scmp.eq.s32.totalorder %s23, 0
      %p58 = por %p56, %p57
      %p59 = scmp.ne.s32.totalorder %s45, %s46
      %p60 = scmp.eq.s32.totalorder %s24, 1
      %p61 = por %p59, %p60
      %p63 = scmp.ne.s32.totalorder %s46, %s62
      %p64 = scmp.eq.s32.totalorder %s24, 0
      %p65 = por %p63, %p64
      %s66 = ssub.s32 %s25, %s37
      %s67 = ssub.s32 %s26, %s33
      %s68 = sor.u32 %s66, %s67
      %p69 = scmp.eq.s32.totalorder %s68, 0
      %s71 = sadd.s32 %s70, 1
      %s72 = scalar_select %p69, %s70, %s71
      %p75 = pneg %p69
      %p76 = scmp.eq.s32.totalorder %s18, 1
      %p77 = por %p75, %p76
      %p78 = scmp.ne.s32.totalorder %s70, %s73
      %p79 = scmp.eq.s32.totalorder %s18, 0
      %p80 = por %p78, %p79
      %p81 = scmp.ne.s32.totalorder %s70, %s73
      %p82 = scmp.eq.s32.totalorder %s23, 1
      %p83 = por %p81, %p82
      %p84 = scmp.ne.s32.totalorder %s73, %s74
      %p85 = scmp.eq.s32.totalorder %s23, 0
      %p86 = por %p84, %p85
      %p87 = scmp.ne.s32.totalorder %s73, %s74
      %p88 = scmp.eq.s32.totalorder %s24, 1
      %p89 = por %p87, %p88
      %p91 = scmp.ne.s32.totalorder %s74, %s90
      %p92 = scmp.eq.s32.totalorder %s24, 0
      %p93 = por %p91, %p92
      %s94 = ssub.s32 %s25, %s37
      %s95 = ssub.s32 %s26, %s33
      %s96 = sor.u32 %s94, %s95
      %p97 = scmp.eq.s32.totalorder %s96, 0
      %s99 = sadd.s32 %s98, 1
      %s100 = scalar_select %p97, %s98, %s99
      %p103 = pneg %p97
      %p104 = scmp.eq.s32.totalorder %s18, 1
      %p105 = por %p103, %p104
      %p106 = scmp.ne.s32.totalorder %s98, %s101
      %p107 = scmp.eq.s32.totalorder %s18, 0
      %p108 = por %p106, %p107
      %p109 = scmp.ne.s32.totalorder %s98, %s101
      %p110 = scmp.eq.s32.totalorder %s23, 1
      %p111 = por %p109, %p110
      %p112 = scmp.ne.s32.totalorder %s101, %s102
      %p113 = scmp.eq.s32.totalorder %s23, 0
      %p114 = por %p112, %p113
      %p115 = scmp.ne.s32.totalorder %s101, %s102
      %p116 = scmp.eq.s32.totalorder %s24, 1
      %p117 = por %p115, %p116
      %p119 = scmp.ne.s32.totalorder %s102, %s118
      %p120 = scmp.eq.s32.totalorder %s24, 0
      %p121 = por %p119, %p120
      %p122 = scmp.le.s32.totalorder 1, %s18
      %p123 = scmp.lt.s32.totalorder %s18, 3
      %p124 = pnand %p122, %p123
      %p125 = pneg %p124
      // Predicated region
      $region9: #{tpu_custom_call.1} parent=5 // pred_check
        _
      $region10: #{tpu_custom_call.1} parent=5 // pred_check_branch
        %127 = sbr.rel (%p124) target = $region12
      $region11: #{tpu_custom_call.1} parent=5 // pred_region
        %s128 = ssub.s32 %s18, 1
      $region12: #{tpu_custom_call.1} parent=5 // pred_fallthru
        _
      %p129 = scmp.lt.s32.totalorder %s18, 2
      // Predicated region
      $region13: #{tpu_custom_call.1} parent=5 // pred_check
        %p130 = pneg %p129
      $region14: #{tpu_custom_call.1} parent=5 // pred_check_branch
        %132 = sbr.rel (%p130) target = $region16
      $region15: #{tpu_custom_call.1} parent=5 // pred_region
        // Predicated region
        $region17: #{tpu_custom_call.1} parent=15 // pred_check
          %p133 = pneg %p52
        $region18: #{tpu_custom_call.1} parent=15 // pred_check_branch
          %135 = sbr.rel (%p133) target = $region20
        $region19: #{tpu_custom_call.1} parent=15 // pred_region
          %s136 = sand.u32 %s42, 1
          %s137 = scalar_lea.sflag [#allocation3], %s136
          %s138 = sand.u32 %s42, 1
          %s139 = smul.addr %s138, 4
          %s140 = scalar_lea.vmem [#allocation2], %s139
          %142 = vsyncadd %s137, 0
          %s143 = sadd.s32 %s26, %s25
          %s144 = smul.addr %s143, 4
          %s145 = scalar_lea.hbm %s0, %s144
          %s147 = sshll.u32 %s145, 4
          %s148 = int_to_ptr.hbm [resolvable:$true] %s147
          %s149 = sshll.u32 %s140, 4
          %s150 = int_to_ptr.vmem [resolvable:$true] %s149
          %152 = dma.hbm_to_vmem [thread:$0]  %s148, 64, %s150, %s137
        $region20: #{tpu_custom_call.1} parent=15 // pred_fallthru
          _
      $region16: #{tpu_custom_call.1} parent=5 // pred_fallthru
        _
      %p153 = scmp.le.s32.totalorder 1, %s18
      %p154 = scmp.lt.s32.totalorder %s18, 3
      %p155 = pnand %p153, %p154
      %p156 = pneg %p155
      // Predicated region
      $region21: #{tpu_custom_call.1} parent=5 // pred_check
        _
      $region22: #{tpu_custom_call.1} parent=5 // pred_check_branch
        %158 = sbr.rel (%p155) target = $region24
      $region23: #{tpu_custom_call.1} parent=5 // pred_region
        %s159 = ssub.s32 %s18, 1
        %s160 = sand.u32 %s45, 1
        %s161 = scalar_lea.sflag [#allocation3], %s160
        %s162 = sand.u32 %s45, 1
        %s163 = smul.addr %s162, 4
        %s164 = scalar_lea.vmem [#allocation2], %s163
        // Predicated region
        $region25: #{tpu_custom_call.1} parent=23 // pred_check
          %p165 = pneg %p58
        $region26: #{tpu_custom_call.1} parent=23 // pred_check_branch
          %167 = sbr.rel (%p165) target = $region28
        $region27: #{tpu_custom_call.1} parent=23 // pred_region
          %169 = dma.done %s161, 64
        $region28: #{tpu_custom_call.1} parent=23 // pred_fallthru
          _
        %s170 = sand.u32 %s45, 1
        %s171 = scalar_lea.sflag [#allocation3], %s170
        %s172 = sand.u32 %s45, 1
        %s173 = smul.addr %s172, 4
        %s174 = scalar_lea.vmem [#allocation2], %s173
        %p175 = pneg %p58
        %p176 = pneg %p55
        %p177 = pneg %p86
        %p178 = pneg %p83
        %s179 = sand.u32 %s73, 1
        %s180 = scalar_lea.sflag [#allocation4], %s179
        %s181 = sand.u32 %s73, 1
        %s182 = smul.addr %s181, 2
        %s183 = scalar_lea.vmem [#allocation5], %s182
        %p184 = pneg %p114
        %p185 = pneg %p111
        %s186 = sand.u32 %s101, 1
        %s187 = scalar_lea.sflag [#allocation7], %s186
        %s188 = sand.u32 %s101, 1
        %s189 = smul.addr %s188, 2
        %s190 = scalar_lea.vmem [#allocation6], %s189
        %v191 = vld [vmem:[%s164] sm:$0x3]
        %vm192 = vcmask 58368
        %193 = vst.msk [vmem:[%s183] sm:$0x3] %vm192, %v191
        %v194 = vld [vmem:[%s164 + $0x2] sm:$0x3]
        %195 = vst.msk [vmem:[%s190] sm:$0x3] %vm192, %v194
        %s196 = sand.u32 %s73, 1
        %s197 = scalar_lea.sflag [#allocation4], %s196
        %s198 = sand.u32 %s73, 1
        %s199 = smul.addr %s198, 2
        %s200 = scalar_lea.vmem [#allocation5], %s199
        %s201 = sand.u32 %s101, 1
        %s202 = scalar_lea.sflag [#allocation7], %s201
        %s203 = sand.u32 %s101, 1
        %s204 = smul.addr %s203, 2
        %s205 = scalar_lea.vmem [#allocation6], %s204
        // Predicated region
        $region29: #{tpu_custom_call.1} parent=23 // pred_check
          %p206 = pneg %p83
        $region30: #{tpu_custom_call.1} parent=23 // pred_check_branch
          %208 = sbr.rel (%p206) target = $region32
        $region31: #{tpu_custom_call.1} parent=23 // pred_region
          %210 = vsyncadd %s197, 0
          %s211 = sadd.s32 %s28, %s27
          %s212 = smul.addr %s211, 2
          %s213 = scalar_lea.hbm %s1, %s212
          %s215 = sshll.u32 %s200, 4
          %s216 = int_to_ptr.vmem [resolvable:$true] %s215
          %s217 = sshll.u32 %s213, 4
          %s218 = int_to_ptr.hbm [resolvable:$true] %s217
          %220 = dma.vmem_to_hbm [thread:$0]  %s216, 32, %s218, %s197
        $region32: #{tpu_custom_call.1} parent=23 // pred_fallthru
          _
        // Predicated region
        $region33: #{tpu_custom_call.1} parent=23 // pred_check
          %p221 = pneg %p111
        $region34: #{tpu_custom_call.1} parent=23 // pred_check_branch
          %223 = sbr.rel (%p221) target = $region36
        $region35: #{tpu_custom_call.1} parent=23 // pred_region
          %225 = vsyncadd %s202, 0
          %s226 = sadd.s32 %s28, %s27
          %s227 = smul.addr %s226, 2
          %s228 = scalar_lea.hbm %s2, %s227
          %s230 = sshll.u32 %s205, 4
          %s231 = int_to_ptr.vmem [resolvable:$true] %s230
          %s232 = sshll.u32 %s228, 4
          %s233 = int_to_ptr.hbm [resolvable:$true] %s232
          %235 = dma.vmem_to_hbm [thread:$0]  %s231, 32, %s233, %s202
        $region36: #{tpu_custom_call.1} parent=23 // pred_fallthru
          _
      $region24: #{tpu_custom_call.1} parent=5 // pred_fallthru
        _
      %p236 = scmp.le.s32.totalorder 2, %s18
      // Predicated region
      $region37: #{tpu_custom_call.1} parent=5 // pred_check
        %p237 = pneg %p236
      $region38: #{tpu_custom_call.1} parent=5 // pred_check_branch
        %239 = sbr.rel (%p237) target = $region40
      $region39: #{tpu_custom_call.1} parent=5 // pred_region
        %s240 = ssub.s32 %s18, 2
        // Predicated region
        $region41: #{tpu_custom_call.1} parent=39 // pred_check
          %p241 = pneg %p89
        $region42: #{tpu_custom_call.1} parent=39 // pred_check_branch
          %243 = sbr.rel (%p241) target = $region44
        $region43: #{tpu_custom_call.1} parent=39 // pred_region
          %s244 = sand.u32 %s74, 1
          %s245 = scalar_lea.sflag [#allocation4], %s244
          %s246 = sand.u32 %s74, 1
          %s247 = smul.addr %s246, 2
          %s248 = scalar_lea.vmem [#allocation5], %s247
          %250 = dma.done %s245, 32
        $region44: #{tpu_custom_call.1} parent=39 // pred_fallthru
          _
        // Predicated region
        $region45: #{tpu_custom_call.1} parent=39 // pred_check
          %p251 = pneg %p117
        $region46: #{tpu_custom_call.1} parent=39 // pred_check_branch
          %253 = sbr.rel (%p251) target = $region48
        $region47: #{tpu_custom_call.1} parent=39 // pred_region
          %s254 = sand.u32 %s102, 1
          %s255 = scalar_lea.sflag [#allocation7], %s254
          %s256 = sand.u32 %s102, 1
          %s257 = smul.addr %s256, 2
          %s258 = scalar_lea.vmem [#allocation6], %s257
          %260 = dma.done %s255, 32
        $region48: #{tpu_custom_call.1} parent=39 // pred_fallthru
          _
      $region40: #{tpu_custom_call.1} parent=5 // pred_fallthru
        _
    $region6: #{tpu_custom_call.1} parent=1 // loop_footer
      %s22 = sadd.s32 1, %s18
    $region7: #{tpu_custom_call.1} parent=1 // loop_footer_branch
      %17 = sbr.rel target = $region3
    $region8: #{tpu_custom_call.1} parent=1 // loop_exit
      _
    %261 = vsyncpa [#allocation3], 1
    %s262 = scalar_lea.sflag [#allocation3], 1
    %263 = vsyncpa %s262, 1
    %264 = vsyncpa [#allocation4], 1
    %s265 = scalar_lea.sflag [#allocation4], 1
    %266 = vsyncpa %s265, 1
    %267 = vsyncpa [#allocation7], 1
    %s268 = scalar_lea.sflag [#allocation7], 1
    %269 = vsyncpa %s268, 1

</llo_original>
